<compile_context>
chip_gen: v7x
topology: tpu7x:2x2x1
jax: 0.10.0
libtpu: 0.0.40
codegen_flags: <defaults>
</compile_context>

<pallas_src>
import functools

import jax
import jax.numpy as jnp
from jax.experimental import pallas as pl
from jax.experimental.pallas import tpu as pltpu


def _round_up(x, m):
    return (x + m - 1) // m * m


def _pick_hidden_tile(H, max_th=512):
    """Largest multiple of 128 dividing H and <= max_th (else full H)."""
    if H <= max_th or H % 128 != 0:
        return H
    th = max_th - (max_th % 128)
    while th > 128 and H % th != 0:
        th -= 128
    return th if H % th == 0 else H


def _ffn_kernel(x_ref, w1_ref, b1_ref, w2_ref, b2_ref, o_ref, acc_ref,
                *, training, p_drop, seed):
    # x_ref:  (TM, C)  bf16 row tile of tokens
    # w1_ref: (C, TH)  bf16 column tile of W1
    # b1_ref: (1, TH)  f32
    # w2_ref: (TH, C)  bf16 row tile of W2
    # b2_ref: (1, C)   f32
    # o_ref:  (TM, C)
    # acc_ref:(TM, C)  f32 accumulator scratch (persists across k steps)
    k = pl.program_id(1)
    k_last = pl.num_programs(1) - 1

    @pl.when(k == 0)
    def _init():
        acc_ref[...] = jnp.zeros_like(acc_ref)

    # Linear 1 (column block) + bias + ReLU.  bf16 MXU, f32 accumulate.
    h = jnp.dot(x_ref[...], w1_ref[...], preferred_element_type=jnp.float32)
    h = jnp.maximum(h + b1_ref[...], 0.0)

    # Linear 2 (matching row block of W2), accumulate into f32 scratch.
    acc_ref[...] += jnp.dot(h.astype(w2_ref.dtype), w2_ref[...],
                            preferred_element_type=jnp.float32)

    @pl.when(k == k_last)
    def _finalize():
        y = acc_ref[...] + b2_ref[...]
        if training and p_drop > 0.0:
            # Inverted dropout; pure integer threshold compare (no int->float).
            # TODO(synk): thread a per-training-step seed from the caller so
            # successive steps don't reuse the same mask.
            pltpu.prng_seed(seed + pl.program_id(0))
            bits = pltpu.bitcast(pltpu.prng_random_bits(y.shape), jnp.uint32)
            thresh = jnp.uint32(min(int(p_drop * (1 << 32)), (1 << 32) - 1))
            keep = bits >= thresh
            y = jnp.where(keep, y * (1.0 / (1.0 - p_drop)), 0.0)
        o_ref[...] = y.astype(o_ref.dtype)


def feed_forward(x, w1, b1, w2, b2, *, training=False, p_drop=0.2, seed=0,
                 block_rows=256, block_hidden=512):
    """x: (B, T, C).  w1: (C, 4C), b1: (4C,), w2: (4C, C), b2: (C,)."""
    B, T, C = x.shape
    Cw, H = w1.shape
    assert Cw == C and w2.shape == (H, C) and b1.shape == (H,) and b2.shape == (C,)
    M = B * T

    # Row tile: as large as possible (MXU utilization, fewer grid steps);
    # sublane dim must stay a multiple of 8.  Pad tokens if needed.
    TM = min(block_rows, _round_up(M, 8))
    M_pad = _round_up(M, TM)

    TH = _pick_hidden_tile(H, block_hidden)
    n_k = H // TH

    x2d = x.reshape(M, C)
    if M_pad != M:
        x2d = jnp.pad(x2d, ((0, M_pad - M), (0, 0)))

    # bf16 MXU operands (cast once, outside the kernel); f32 biases.
    x2d_bf = x2d.astype(jnp.bfloat16)
    w1_bf = w1.astype(jnp.bfloat16)
    w2_bf = w2.astype(jnp.bfloat16)
    b1r = b1.reshape(1, H).astype(jnp.float32)
    b2r = b2.reshape(1, C).astype(jnp.float32)

    kernel = functools.partial(_ffn_kernel, training=bool(training),
                               p_drop=float(p_drop), seed=int(seed))

    out_itemsize = jnp.dtype(x.dtype).itemsize
    flops = 4 * M_pad * C * H  # two matmuls, 2 flops/MAC each
    bytes_accessed = (x2d_bf.size * 2 + M_pad * C * out_itemsize
                      + (w1_bf.size + w2_bf.size) * 2 + (H + C) * 4)

    # Rough VMEM budget: double-buffered tiles + f32 accumulator + intermediate.
    est = (2 * TM * C * 2 + 2 * TM * C * out_itemsize
           + 2 * (C * TH + TH * C) * 2 + 2 * (TH + C) * 4
           + TM * C * 4 + TM * TH * 4)
    vmem_limit = int(min(max(2 * est, 32 * 1024 * 1024), 64 * 1024 * 1024))

    grid = (M_pad // TM, n_k)
    out2d = pl.pallas_call(
        kernel,
        out_shape=jax.ShapeDtypeStruct((M_pad, C), x.dtype),
        grid_spec=pltpu.PrefetchScalarGridSpec(
            num_scalar_prefetch=0,
            grid=grid,
            in_specs=[
                pl.BlockSpec((TM, C), lambda i, k: (i, 0)),   # x row tile
                pl.BlockSpec((C, TH), lambda i, k: (0, k)),   # w1 column tile
                pl.BlockSpec((1, TH), lambda i, k: (0, k)),   # b1 tile
                pl.BlockSpec((TH, C), lambda i, k: (k, 0)),   # w2 row tile
                pl.BlockSpec((1, C), lambda i, k: (0, 0)),    # b2
            ],
            out_specs=pl.BlockSpec((TM, C), lambda i, k: (i, 0)),
            scratch_shapes=[pltpu.VMEM((TM, C), jnp.float32)],
        ),
        compiler_params=pltpu.CompilerParams(
            dimension_semantics=("parallel", "arbitrary"),
            vmem_limit_bytes=vmem_limit),
        cost_estimate=pl.CostEstimate(
            flops=flops, transcendentals=0, bytes_accessed=bytes_accessed),
    )(x2d_bf, w1_bf, b1r, w2_bf, b2r)

    return out2d[:M].reshape(B, T, C)


def init_params(key, n_embd):
    """Deterministic init mimicking nn.Linear (uniform +-1/sqrt(fan_in))."""
    k1, k2, k3, k4 = jax.random.split(key, 4)
    hid = 4 * n_embd
    bound1 = 1.0 / (n_embd ** 0.5)
    bound2 = 1.0 / (hid ** 0.5)
    # stored as (in_features, out_features)
    w1 = jax.random.uniform(k1, (n_embd, hid), jnp.float32, -bound1, bound1)
    b1 = jax.random.uniform(k2, (hid,), jnp.float32, -bound1, bound1)
    w2 = jax.random.uniform(k3, (hid, n_embd), jnp.float32, -bound2, bound2)
    b2 = jax.random.uniform(k4, (n_embd,), jnp.float32, -bound2, bound2)
    return w1, b1, w2, b2


if __name__ == "__main__":
    key = jax.random.PRNGKey(0)
    kx, kp = jax.random.split(key)

    B, T, n_embd = 2, 8, 32          # small shapes: batch=2, seq=8, hidden=32
    x = jax.random.normal(kx, (B, T, n_embd), jnp.float32)
    w1, b1, w2, b2 = init_params(kp, n_embd)

    # Eval-mode forward (Dropout is identity in eval; training path is
    # implemented in-kernel via the on-chip PRNG, enable with training=True).
    out = feed_forward(x, w1, b1, w2, b2, training=False)
    out = jax.block_until_ready(out)

    # Pure-JAX reference with matching bf16 matmul inputs / f32 accumulation.
    def bf(a):
        return a.astype(jnp.bfloat16)

    x2d = x.reshape(-1, n_embd)
    h_ref = jnp.maximum(
        jnp.dot(bf(x2d), bf(w1), preferred_element_type=jnp.float32) + b1, 0.0)
    ref = jnp.dot(bf(h_ref), bf(w2), preferred_element_type=jnp.float32) + b2
    ref = ref.reshape(B, T, n_embd)
    assert jnp.allclose(out, ref, atol=2e-2, rtol=2e-2), "mismatch vs reference"

    print("KERNEL_OK")
</pallas_src>

<mosaic_0001>
module attributes {stable_mosaic.version = 11 : i64} {
  func.func @_ffn_kernel(%arg0: i32, %arg1: i32, %arg2: memref<16x32xbf16, #tpu.memory_space<vmem>>, %arg3: memref<32x128xbf16, #tpu.memory_space<vmem>>, %arg4: memref<1x128xf32, #tpu.memory_space<vmem>>, %arg5: memref<128x32xbf16, #tpu.memory_space<vmem>>, %arg6: memref<1x32xf32, #tpu.memory_space<vmem>>, %arg7: memref<16x32xf32, #tpu.memory_space<vmem>>, %arg8: memref<16x32xf32, #tpu.memory_space<vmem>>) attributes {dimension_semantics = [#tpu.dimension_semantics<parallel>, #tpu.dimension_semantics<arbitrary>], iteration_bounds = array<i64: 1, 1>, scalar_prefetch = 0 : i64, scratch_operands = 1 : i64, tpu.core_type = #tpu.core_type<tc>, window_params = [{transform_indices = @transform_0, window_bounds = array<i64: 16, 32>}, {transform_indices = @transform_1, window_bounds = array<i64: 32, 128>}, {transform_indices = @transform_2, window_bounds = array<i64: 1, 128>}, {transform_indices = @transform_3, window_bounds = array<i64: 128, 32>}, {pipeline_mode = #tpu.pipeline_mode<synchronous>, transform_indices = @transform_4, window_bounds = array<i64: 1, 32>}, {transform_indices = @transform_5, window_bounds = array<i64: 16, 32>}]} {
    %c0_i32 = arith.constant 0 : i32
    %0 = arith.cmpi eq, %arg1, %c0_i32 : i32
    %1 = arith.extui %0 : i1 to i32
    %c0_i32_0 = arith.constant 0 : i32
    %2 = arith.cmpi ne, %1, %c0_i32_0 : i32
    scf.if %2 {
      %cst_16 = arith.constant 0.000000e+00 : f32
      %20 = vector.broadcast %cst_16 : f32 to vector<16x32xf32>
      %c0_17 = arith.constant 0 : index
      %c0_18 = arith.constant 0 : index
      %21 = vector.load %arg8[%c0_17, %c0_18] : memref<16x32xf32, #tpu.memory_space<vmem>>, vector<16x32xf32>
      tpu.vector_store %arg8[%c0_17, %c0_18], %20 {strides = array<i32>} : memref<16x32xf32, #tpu.memory_space<vmem>>, vector<16x32xf32>,
    } else {
    }
    %c0 = arith.constant 0 : index
    %c0_1 = arith.constant 0 : index
    %3 = vector.load %arg2[%c0, %c0_1] : memref<16x32xbf16, #tpu.memory_space<vmem>>, vector<16x32xbf16>
    %c0_2 = arith.constant 0 : index
    %c0_3 = arith.constant 0 : index
    %4 = vector.load %arg3[%c0_2, %c0_3] : memref<32x128xbf16, #tpu.memory_space<vmem>>, vector<32x128xbf16>
    %cst = arith.constant dense<0.000000e+00> : vector<16x128xf32>
    %5 = tpu.matmul %3, %4, %cst {dimension_numbers = #tpu.dot_dimension_numbers<[1], [0], [0], [1], [0, 0, 1, 1], [], []>} : vector<16x32xbf16>, vector<32x128xbf16>, vector<16x128xf32> -> vector<16x128xf32>
    %c0_4 = arith.constant 0 : index
    %c0_5 = arith.constant 0 : index
    %6 = vector.load %arg4[%c0_4, %c0_5] : memref<1x128xf32, #tpu.memory_space<vmem>>, vector<1x128xf32>
    %7 = vector.broadcast %6 : vector<1x128xf32> to vector<16x128xf32>
    %8 = arith.addf %5, %7 : vector<16x128xf32>
    %cst_6 = arith.constant 0.000000e+00 : f32
    %9 = vector.broadcast %cst_6 : f32 to vector<16x128xf32>
    %10 = arith.maximumf %8, %9 : vector<16x128xf32>
    %c0_7 = arith.constant 0 : index
    %c0_8 = arith.constant 0 : index
    %11 = vector.load %arg8[%c0_7, %c0_8] : memref<16x32xf32, #tpu.memory_space<vmem>>, vector<16x32xf32>
    %12 = arith.truncf %10 : vector<16x128xf32> to vector<16x128xbf16>
    %c0_9 = arith.constant 0 : index
    %c0_10 = arith.constant 0 : index
    %13 = vector.load %arg5[%c0_9, %c0_10] : memref<128x32xbf16, #tpu.memory_space<vmem>>, vector<128x32xbf16>
    %cst_11 = arith.constant dense<0.000000e+00> : vector<16x32xf32>
    %14 = tpu.matmul %12, %13, %cst_11 {dimension_numbers = #tpu.dot_dimension_numbers<[1], [0], [0], [1], [0, 0, 1, 1], [], []>} : vector<16x128xbf16>, vector<128x32xbf16>, vector<16x32xf32> -> vector<16x32xf32>
    %15 = arith.addf %11, %14 : vector<16x32xf32>
    %c0_12 = arith.constant 0 : index
    %c0_13 = arith.constant 0 : index
    %16 = vector.load %arg8[%c0_12, %c0_13] : memref<16x32xf32, #tpu.memory_space<vmem>>, vector<16x32xf32>
    tpu.vector_store %arg8[%c0_12, %c0_13], %15 {strides = array<i32>} : memref<16x32xf32, #tpu.memory_space<vmem>>, vector<16x32xf32>,
    %c0_i32_14 = arith.constant 0 : i32
    %17 = arith.cmpi eq, %arg1, %c0_i32_14 : i32
    %18 = arith.extui %17 : i1 to i32
    %c0_i32_15 = arith.constant 0 : i32
    %19 = arith.cmpi ne, %18, %c0_i32_15 : i32
    scf.if %19 {
      %c0_16 = arith.constant 0 : index
      %c0_17 = arith.constant 0 : index
      %20 = vector.load %arg8[%c0_16, %c0_17] : memref<16x32xf32, #tpu.memory_space<vmem>>, vector<16x32xf32>
      %c0_18 = arith.constant 0 : index
      %c0_19 = arith.constant 0 : index
      %21 = vector.load %arg6[%c0_18, %c0_19] : memref<1x32xf32, #tpu.memory_space<vmem>>, vector<1x32xf32>
      %22 = vector.broadcast %21 : vector<1x32xf32> to vector<16x32xf32>
      %23 = arith.addf %20, %22 : vector<16x32xf32>
      %c0_20 = arith.constant 0 : index
      %c0_21 = arith.constant 0 : index
      %24 = vector.load %arg7[%c0_20, %c0_21] : memref<16x32xf32, #tpu.memory_space<vmem>>, vector<16x32xf32>
      tpu.vector_store %arg7[%c0_20, %c0_21], %23 {strides = array<i32>} : memref<16x32xf32, #tpu.memory_space<vmem>>, vector<16x32xf32>,
    } else {
    }
    return
  }
  func.func @transform_0(%arg0: i32, %arg1: i32) -> (i32, i32) {
    %c0_i32 = arith.constant 0 : i32
    %c0_i32_0 = arith.constant 0 : i32
    return %arg0, %c0_i32 : i32, i32
  }
  func.func @transform_1(%arg0: i32, %arg1: i32) -> (i32, i32) {
    %c0_i32 = arith.constant 0 : i32
    %c0_i32_0 = arith.constant 0 : i32
    return %c0_i32, %arg1 : i32, i32
  }
  func.func @transform_2(%arg0: i32, %arg1: i32) -> (i32, i32) {
    %c0_i32 = arith.constant 0 : i32
    %c0_i32_0 = arith.constant 0 : i32
    return %c0_i32, %arg1 : i32, i32
  }
  func.func @transform_3(%arg0: i32, %arg1: i32) -> (i32, i32) {
    %c0_i32 = arith.constant 0 : i32
    %c0_i32_0 = arith.constant 0 : i32
    return %arg1, %c0_i32 : i32, i32
  }
  func.func @transform_4(%arg0: i32, %arg1: i32) -> (i32, i32) {
    %c0_i32 = arith.constant 0 : i32
    %c0_i32_0 = arith.constant 0 : i32
    %c0_i32_1 = arith.constant 0 : i32
    return %c0_i32, %c0_i32_0 : i32, i32
  }
  func.func @transform_5(%arg0: i32, %arg1: i32) -> (i32, i32) {
    %c0_i32 = arith.constant 0 : i32
    %c0_i32_0 = arith.constant 0 : i32
    return %arg0, %c0_i32 : i32, i32
  }
}

</mosaic_0001>

<llo_original>
// kernel: tpu_custom_call.1
$region0: #{tpu_custom_call.1}
  #allocation0 [shape = 'u32[]', space=smem, size = 0x4, offset = 0x4, fixed_abs, tag = 'smem constant byte address 0x4 - core index']
  #allocation1 [shape = 'u32[144,128]{1,0:T(1,128)}', space=vmem, size = 0x12000, scoped, tag = 'internal scratch']
  #allocation2 [shape = 'f32[16,32]{1,0:T(8,128)}', space=vmem, size = 0x2000, scoped, tag = 'scratch operand']
  %s0 = inlined_call_operand.vmem [shape: bf16[16,32], index: 0, kind: input, shape index: {}]
  %s1 = inlined_call_operand.vmem [shape: bf16[32,128], index: 1, kind: input, shape index: {}]
  %s2 = inlined_call_operand.vmem [shape: f32[1,128], index: 2, kind: input, shape index: {}]
  %s3 = inlined_call_operand.vmem [shape: bf16[128,32], index: 3, kind: input, shape index: {}]
  %s4 = inlined_call_operand.vmem [shape: f32[1,32], index: 4, kind: input, shape index: {}]
  %s5 = inlined_call_operand.hbm [shape: f32[16,32], index: 5, kind: output, shape index: {}]
  %s6 = sld [smem:[#allocation0]]
  $region38: #{tpu_custom_call.1} parent=0
    _
  %s8 = ssub.s32 1, %s6
  %s9 = scalar_select 0, %s8, %s6
  $region1: #{tpu_custom_call.1} parent=0
    #allocation3 [shape = 'u8[8192]{0}', space=vmem, size = 0x2000, scoped, tag = 'output window, operand 0, single buffered']
    #allocation4 [shape = 's32[1]{0}', space=sflag, size = 0x4, scoped, tag = 'scoped memory for tpu_custom_call.1']
    %10 = vsyncpa [#allocation4], 0
    // Predicated region
    $region2: #{tpu_custom_call.1} parent=1 // pred_check
      _
    $region3: #{tpu_custom_call.1} parent=1 // pred_check_branch
      %12 = sbr.rel (0) target = $region5
    $region4: #{tpu_custom_call.1} parent=1 // pred_region
      _
    $region5: #{tpu_custom_call.1} parent=1 // pred_fallthru
      _
    // Predicated region
    $region6: #{tpu_custom_call.1} parent=1 // pred_check
      _
    $region7: #{tpu_custom_call.1} parent=1 // pred_check_branch
      %14 = sbr.rel (0) target = $region9
    $region8: #{tpu_custom_call.1} parent=1 // pred_region
      _
    $region9: #{tpu_custom_call.1} parent=1 // pred_fallthru
      _
    // Predicated region
    $region10: #{tpu_custom_call.1} parent=1 // pred_check
      _
    $region11: #{tpu_custom_call.1} parent=1 // pred_check_branch
      %16 = sbr.rel (0) target = $region13
    $region12: #{tpu_custom_call.1} parent=1 // pred_region
      _
    $region13: #{tpu_custom_call.1} parent=1 // pred_fallthru
      _
    // Predicated region
    $region14: #{tpu_custom_call.1} parent=1 // pred_check
      _
    $region15: #{tpu_custom_call.1} parent=1 // pred_check_branch
      %18 = sbr.rel (0) target = $region17
    $region16: #{tpu_custom_call.1} parent=1 // pred_region
      _
    $region17: #{tpu_custom_call.1} parent=1 // pred_fallthru
      _
    // Predicated region
    $region18: #{tpu_custom_call.1} parent=1 // pred_check
      _
    $region19: #{tpu_custom_call.1} parent=1 // pred_check_branch
      %20 = sbr.rel (0) target = $region21
    $region20: #{tpu_custom_call.1} parent=1 // pred_region
      _
    $region21: #{tpu_custom_call.1} parent=1 // pred_fallthru
      _
    %p22 = scmp.eq.s32.totalorder 0, 0
    // Predicated region
    $region22: #{tpu_custom_call.1} parent=1 // pred_check
      %p23 = pneg %p22
    $region23: #{tpu_custom_call.1} parent=1 // pred_check_branch
      %25 = sbr.rel (%p23) target = $region25
    $region24: #{tpu_custom_call.1} parent=1 // pred_region
      %vm26 = vcmask 261120
      %27 = vst.msk [vmem:[#allocation2] sm:$0xff] %vm26, 0.0
      %28 = vst.msk [vmem:[#allocation2 + $0x8] sm:$0xff] %vm26, 0.0
    $region25: #{tpu_custom_call.1} parent=1 // pred_fallthru
      _
    %v29 = vld [vmem:[%s0] sm:$0xf]
    %v30 = vld [vmem:[%s0 + $0x4] sm:$0xf]
    %v31 = vld [vmem:[%s1] sm:$0xf]
    %v32 = vld [vmem:[%s1 + $0x4] sm:$0xf]
    %v33 = vld [vmem:[%s1 + $0x8] sm:$0xf]
    %v34 = vld [vmem:[%s1 + $0xc] sm:$0xf]
    %v35 = vld [vmem:[%s2] sm:$0x1]
    %v37 = vlaneseq
    %v38 = vshrl.u32 %v37, 7
    %v39 = vsub.s32 0, %v38
    %v40 = vrot.slane %v35, %v39
    %v44 = vunpack.c.l.b16 %v29
    %v45 = vunpack.c.l.b16 %v30
    %v46 = vpack.c.b16 %v45, %v44
    %v51 = vunpack.c.l.b16 %v31
    %v52 = vunpack.c.l.b16 %v32
    %v53 = vunpack.c.l.b16 %v33
    %v54 = vunpack.c.l.b16 %v34
    %v55 = vpack.c.b16 %v52, %v51
    %v56 = vpack.c.b16 %v54, %v53
    %vm59 = vcmask 261120
    %v61 = vsel %vm59, %v46, 0
    %63 = vmatprep.subr.bf16.mxu0 0
    %64 = vmatpush1.bf16.msra.mxu0 %v55
    %65 = vmatprep.subr.bf16.mxu0 0
    %66 = vmatpush1.bf16.msra.mxu0 %v56
    %67 = vmatprep.subr.bf16.mxu0 0
    %68 = vmatpush1.bf16.msra.mxu0 0
    %69 = vmatprep.subr.bf16.mxu0 0
    %70 = vmatpush1.bf16.msra.mxu0 0
    %71 = vmatprep.subr.bf16.mxu0 0
    %72 = vmatpush1.bf16.msra.mxu0 0
    %73 = vmatprep.subr.bf16.mxu0 0
    %74 = vmatpush1.bf16.msra.mxu0 0
    %75 = vmatprep.subr.bf16.mxu0 0
    %76 = vmatpush1.bf16.msra.mxu0 0
    %77 = vmatprep.subr.bf16.mxu0 0
    %78 = vmatpush1.bf16.msra.mxu0 0
    %79 = vmatprep.subr.bf16.mxu0 0
    %80 = vmatpush1.bf16.msra.mxu0 0
    %81 = vmatprep.subr.bf16.mxu0 0
    %82 = vmatpush1.bf16.msra.mxu0 0
    %83 = vmatprep.subr.bf16.mxu0 0
    %84 = vmatpush1.bf16.msra.mxu0 0
    %85 = vmatprep.subr.bf16.mxu0 0
    %86 = vmatpush1.bf16.msra.mxu0 0
    %87 = vmatprep.subr.bf16.mxu0 0
    %88 = vmatpush1.bf16.msra.mxu0 0
    %89 = vmatprep.subr.bf16.mxu0 0
    %90 = vmatpush1.bf16.msra.mxu0 0
    %91 = vmatprep.subr.bf16.mxu0 0
    %92 = vmatpush1.bf16.msra.mxu0 0
    %93 = vmatprep.subr.bf16.mxu0 0
    %94 = vmatpush1.bf16.msra.mxu0 0
    %95 = vmatprep.mubr.bf16.mxu0 0
    %96 = vmatmul.mubr.bf16.gmra.mrb[0].mxu0 %v61
    %v97 = vpop.f32.mrb[0].mxu0
    %v98 = vadd.f32 %v40, %v97
    %v99 = vpop.f32.mrb[0].mxu0
    %v100 = vpop.f32.mrb[0].mxu0
    %v101 = vadd.f32 %v40, %v100
    %v102 = vpop.f32.mrb[0].mxu0
    %103 = vdwg.mxu0
    %v104 = vmax.f32 %v98, 0.0
    %v105 = vmax.f32 %v101, 0.0
    %v106 = vld [vmem:[#allocation2] sm:$0xff]
    %v107 = vld [vmem:[#allocation2 + $0x8] sm:$0xff]
    %v108 = vpack.c.bf16 %v105, %v104
    %v109 = vld [vmem:[%s3] sm:$0xf]
    %v110 = vld [vmem:[%s3 + $0x4] sm:$0xf]
    %v111 = vld [vmem:[%s3 + $0x8] sm:$0xf]
    %v112 = vld [vmem:[%s3 + $0xc] sm:$0xf]
    %v113 = vld [vmem:[%s3 + $0x10] sm:$0xf]
    %v114 = vld [vmem:[%s3 + $0x14] sm:$0xf]
    %v115 = vld [vmem:[%s3 + $0x18] sm:$0xf]
    %v116 = vld [vmem:[%s3 + $0x1c] sm:$0xf]
    %v117 = vld [vmem:[%s3 + $0x20] sm:$0xf]
    %v118 = vld [vmem:[%s3 + $0x24] sm:$0xf]
    %v119 = vld [vmem:[%s3 + $0x28] sm:$0xf]
    %v120 = vld [vmem:[%s3 + $0x2c] sm:$0xf]
    %v121 = vld [vmem:[%s3 + $0x30] sm:$0xf]
    %v122 = vld [vmem:[%s3 + $0x34] sm:$0xf]
    %v123 = vld [vmem:[%s3 + $0x38] sm:$0xf]
    %v124 = vld [vmem:[%s3 + $0x3c] sm:$0xf]
    %v141 = vunpack.c.l.b16 %v109
    %v142 = vunpack.c.l.b16 %v110
    %v143 = vunpack.c.l.b16 %v111
    %v144 = vunpack.c.l.b16 %v112
    %v145 = vunpack.c.l.b16 %v113
    %v146 = vunpack.c.l.b16 %v114
    %v147 = vunpack.c.l.b16 %v115
    %v148 = vunpack.c.l.b16 %v116
    %v149 = vunpack.c.l.b16 %v117
    %v150 = vunpack.c.l.b16 %v118
    %v151 = vunpack.c.l.b16 %v119
    %v152 = vunpack.c.l.b16 %v120
    %v153 = vunpack.c.l.b16 %v121
    %v154 = vunpack.c.l.b16 %v122
    %v155 = vunpack.c.l.b16 %v123
    %v156 = vunpack.c.l.b16 %v124
    %v157 = vpack.c.b16 %v142, %v141
    %v158 = vpack.c.b16 %v144, %v143
    %v159 = vpack.c.b16 %v146, %v145
    %v160 = vpack.c.b16 %v148, %v147
    %v161 = vpack.c.b16 %v150, %v149
    %v162 = vpack.c.b16 %v152, %v151
    %v163 = vpack.c.b16 %v154, %v153
    %v164 = vpack.c.b16 %v156, %v155
    %173 = vmatprep.subr.bf16.mxu0 0
    %174 = vmatpush1.bf16.msra.mxu0 %v157
    %175 = vmatprep.subr.bf16.mxu0 0
    %176 = vmatpush1.bf16.msra.mxu0 %v158
    %177 = vmatprep.subr.bf16.mxu0 0
    %178 = vmatpush1.bf16.msra.mxu0 %v159
    %179 = vmatprep.subr.bf16.mxu0 0
    %180 = vmatpush1.bf16.msra.mxu0 %v160
    %181 = vmatprep.subr.bf16.mxu0 0
    %182 = vmatpush1.bf16.msra.mxu0 %v161
    %183 = vmatprep.subr.bf16.mxu0 0
    %184 = vmatpush1.bf16.msra.mxu0 %v162
    %185 = vmatprep.subr.bf16.mxu0 0
    %186 = vmatpush1.bf16.msra.mxu0 %v163
    %187 = vmatprep.subr.bf16.mxu0 0
    %188 = vmatpush1.bf16.msra.mxu0 %v164
    %189 = vmatprep.subr.bf16.mxu0 0
    %190 = vmatpush1.bf16.msra.mxu0 0
    %191 = vmatprep.subr.bf16.mxu0 0
    %192 = vmatpush1.bf16.msra.mxu0 0
    %193 = vmatprep.subr.bf16.mxu0 0
    %194 = vmatpush1.bf16.msra.mxu0 0
    %195 = vmatprep.subr.bf16.mxu0 0
    %196 = vmatpush1.bf16.msra.mxu0 0
    %197 = vmatprep.subr.bf16.mxu0 0
    %198 = vmatpush1.bf16.msra.mxu0 0
    %199 = vmatprep.subr.bf16.mxu0 0
    %200 = vmatpush1.bf16.msra.mxu0 0
    %201 = vmatprep.subr.bf16.mxu0 0
    %202 = vmatpush1.bf16.msra.mxu0 0
    %203 = vmatprep.subr.bf16.mxu0 0
    %204 = vmatpush1.bf16.msra.mxu0 0
    %205 = vmatprep.mubr.bf16.mxu0 0
    %206 = vmatmul.mubr.bf16.gmra.mrb[0].mxu0 %v108
    %v207 = vpop.f32.mrb[0].mxu0
    %v208 = vadd.f32 0.0, %v207
    %v209 = vpop.f32.mrb[0].mxu0
    %v210 = vpop.f32.mrb[0].mxu0
    %v211 = vadd.f32 0.0, %v210
    %v212 = vpop.f32.mrb[0].mxu0
    %213 = vdwg.mxu0
    %v214 = vadd.f32 %v106, %v208
    %v215 = vadd.f32 %v107, %v211
    %216 = vst.msk [vmem:[#allocation2] sm:$0xff] %vm59, %v214
    %217 = vst.msk [vmem:[#allocation2 + $0x8] sm:$0xff] %vm59, %v215
    // Predicated region
    $region26: #{tpu_custom_call.1} parent=1 // pred_check
      %p218 = pneg %p22
    $region27: #{tpu_custom_call.1} parent=1 // pred_check_branch
      %220 = sbr.rel (%p218) target = $region29
    $region28: #{tpu_custom_call.1} parent=1 // pred_region
      %v221 = vld [vmem:[#allocation2] sm:$0xff]
      %v222 = vld [vmem:[#allocation2 + $0x8] sm:$0xff]
      %v223 = vld [vmem:[%s4] sm:$0x1]
      %v225 = vlaneseq
      %v226 = vshrl.u32 %v225, 7
      %v227 = vsub.s32 0, %v226
      %v228 = vrot.slane %v223, %v227
      %v230 = vadd.f32 %v221, %v228
      %v231 = vadd.f32 %v222, %v228
      %232 = vst.msk [vmem:[#allocation3] sm:$0xff] %vm59, %v230
      %233 = vst.msk [vmem:[#allocation3 + $0x8] sm:$0xff] %vm59, %v231
    $region29: #{tpu_custom_call.1} parent=1 // pred_fallthru
      _
    // Predicated region
    $region30: #{tpu_custom_call.1} parent=1 // pred_check
      _
    $region31: #{tpu_custom_call.1} parent=1 // pred_check_branch
      %235 = sbr.rel (0) target = $region33
    $region32: #{tpu_custom_call.1} parent=1 // pred_region
      %s237 = ssub.s32 256, 256
      %238 = vsyncadd [#allocation4], %s237
      %s239 = sshll.u32 [#allocation3], 4
      %s240 = int_to_ptr.vmem [resolvable:$true] %s239
      %245 = dma.vmem_to_hbm [thread:$0]  %s240, 256, %s5, [#allocation4], 128, 128, 8
    $region33: #{tpu_custom_call.1} parent=1 // pred_fallthru
      _
    // Predicated region
    $region34: #{tpu_custom_call.1} parent=1 // pred_check
      _
    $region35: #{tpu_custom_call.1} parent=1 // pred_check_branch
      %247 = sbr.rel (0) target = $region37
    $region36: #{tpu_custom_call.1} parent=1 // pred_region
      %248 = dma.done [#allocation4], 256
    $region37: #{tpu_custom_call.1} parent=1 // pred_fallthru
      _
    %249 = vsyncpa [#allocation4], 1

</llo_original>
